<compile_context>
chip_gen: v7x
topology: tpu7x:2x2x1
jax: 0.10.0
libtpu: 0.0.40
codegen_flags: <defaults>
</compile_context>

<pallas_src>
import functools
import math

import jax
import jax.numpy as jnp
from jax.experimental import pallas as pl
from jax.experimental.pallas import tpu as pltpu


def _round_up(x, m):
    return ((x + m - 1) // m) * m


def _ceil_div(a, b):
    return -(-a // b)


def _vmem_budget_bytes():
    """~75% of per-core VMEM (128 MiB v5e/v6e, 64 MiB v7x); safe fallback."""
    cap = None
    try:
        cap = getattr(pltpu.get_tpu_info(), "vmem_capacity_bytes", None)
    except Exception:
        cap = None
    if not cap:
        cap = 64 * 1024 * 1024  # conservative: v7x per-core VMEM
    return int(cap) * 3 // 4


def _largest_divisor_tile(total, unit, target):
    """Largest multiple of `unit` dividing `total` (itself a multiple of unit), <= target."""
    n_units = total // unit
    hi = max(1, min(n_units, target // unit))
    for d in range(hi, 0, -1):
        if n_units % d == 0:
            return d * unit
    return unit


def _apply_activation(y, activation):
    if activation is None:
        return y
    if activation == "relu":
        return jnp.maximum(y, 0.0)      # VPU — free under MXU/HBM-bound loop
    if activation == "tanh":
        return jnp.tanh(y)              # EUP — separate bundle slot
    if activation == "sigmoid":
        return jax.nn.sigmoid(y)
    if activation == "gelu":
        return jax.nn.gelu(y)
    raise ValueError(f"unsupported activation: {activation!r}")


def _choose_tiles(M, k_pad, n_pad, in_isize, out_isize, sub, budget,
                  tm_target=512, tn_target=512):
    """Pick (tm, gm, m_pad, tn, gn, tk, gk) under a VMEM byte budget."""
    # --- M: adaptive so padding above M stays < one sublane group, not a full tile.
    m_round = _round_up(max(M, 1), sub)
    if m_round <= tm_target:
        tm = m_round
    else:
        gm = _ceil_div(m_round, tm_target)
        tm = _round_up(_ceil_div(m_round, gm), sub)
    gm = _ceil_div(m_round, tm)

    # --- N: tn always divides the 128-rounded N (weight padded once at load time).
    tn = _largest_divisor_tile(n_pad, 128, tn_target)
    gn = n_pad // tn

    # --- Guarantee >=2 blocks along a parallel axis (keeps both v7x TCs busy).
    if gm * gn == 1:
        if m_round >= 2 * sub:
            tm = _round_up(_ceil_div(m_round, 2), sub)
            gm = _ceil_div(m_round, tm)
        elif n_pad >= 256:
            tn = _largest_divisor_tile(n_pad, 128, n_pad // 2)
            gn = n_pad // tn

    m_pad = tm * gm

    # --- K: collapse the reduction into the kernel when the panels fit VMEM.
    usable = int(budget * 0.85)                          # headroom for compiler scratch
    fixed = 2 * tm * tn * out_isize + 2 * 2 * tn * 4     # out tile + bias (double-buffered)
    collapsed = fixed + 2 * (tm + tn) * k_pad * in_isize
    if collapsed <= usable:
        return tm, gm, m_pad, tn, gn, k_pad, 1           # 2-D grid, no accumulator

    # Fallback: 3-D grid with f32 accumulator scratch; size tk to the budget.
    fixed3 = fixed + tm * tn * 4
    avail = max(usable - fixed3, 0)
    tk_cap = max(128, (avail // (2 * (tm + tn) * in_isize)) // 128 * 128)
    tk = _largest_divisor_tile(k_pad, 128, min(tk_cap, k_pad))
    gk = k_pad // tk
    return tm, gm, m_pad, tn, gn, tk, gk


# ----------------------------------------------------------------------------
# Kernels
# ----------------------------------------------------------------------------
def _linear_bias_act_kernel(x_ref, w_ref, b_ref, o_ref, *, activation):
    """Collapsed-K path: one (tm, tn) output tile per grid step, single dot."""
    y = jnp.dot(x_ref[...], w_ref[...], preferred_element_type=jnp.float32)
    y = y + b_ref[...].astype(jnp.float32)               # (1, tn) broadcasts
    o_ref[...] = _apply_activation(y, activation).astype(o_ref.dtype)


def _linear_bias_act_ksplit_kernel(x_ref, w_ref, b_ref, o_ref, acc_ref, *, activation):
    """Large-K fallback: K reduced over grid axis 2 into an f32 accumulator."""
    k = pl.program_id(2)

    @pl.when(k == 0)
    def _init():
        acc_ref[...] = jnp.zeros_like(acc_ref)

    acc_ref[...] += jnp.dot(x_ref[...], w_ref[...], preferred_element_type=jnp.float32)

    @pl.when(k == pl.num_programs(2) - 1)
    def _finalize():
        y = acc_ref[...] + b_ref[...].astype(jnp.float32)
        o_ref[...] = _apply_activation(y, activation).astype(o_ref.dtype)


# ----------------------------------------------------------------------------
# Parameter preparation (one-time, at load) and forward
# ----------------------------------------------------------------------------
def prepare_classifier_params(weight, bias, compute_dtype=None):
    """One-time at parameter-load: transpose, pad to lane-dense 128-multiples, cast.

    weight: (output_size, input_size)  -- PyTorch nn.Linear layout
    bias:   (output_size,)
    compute_dtype: e.g. jnp.bfloat16 to halve operand HBM traffic (accumulation,
                   bias-add and activation stay float32).
    """
    weight = jnp.asarray(weight)
    bias = jnp.asarray(bias)
    n_out, k_in = weight.shape
    k_pad = _round_up(k_in, 128)
    n_pad = _round_up(n_out, 128)

    w_t = weight.T                                        # (K, N)
    if (k_pad, n_pad) != (k_in, n_out):
        w_t = jnp.pad(w_t, ((0, k_pad - k_in), (0, n_pad - n_out)))
    if compute_dtype is not None:
        w_t = w_t.astype(compute_dtype)

    b2 = bias.astype(jnp.float32).reshape(1, -1)
    if n_pad != n_out:
        b2 = jnp.pad(b2, ((0, 0), (0, n_pad - n_out)))

    return {"w_t": w_t, "bias": b2, "in_features": k_in, "out_features": n_out}


def classifier_forward(x, params, *, dropout_rate=0.0, activation=None,
                       training=False, vmem_budget_bytes=None,
                       tm_target=512, tn_target=512):
    """Pallas equivalent of Classifier.forward.

    x:      (..., input_size)
    params: from prepare_classifier_params (weight pre-transposed, pre-padded,
            optionally pre-cast to a lower compute dtype).
    """
    if training and dropout_rate > 0.0:
        # TODO(synk): training-mode dropout (pltpu.prng_seed / prng_random_bits masking).
        raise NotImplementedError("training-mode dropout is not implemented")
    # Eval-mode dropout (and p == 0) is identity.

    w_t, bias2d = params["w_t"], params["bias"]
    K, N = params["in_features"], params["out_features"]
    k_pad, n_pad = w_t.shape
    assert bias2d.shape == (1, n_pad)

    orig_shape = x.shape
    assert orig_shape[-1] == K, f"expected last dim {K}, got {orig_shape[-1]}"
    x2 = x.reshape(-1, K)
    M = x2.shape[0]
    out_dtype = x.dtype

    cdtype = w_t.dtype
    if x2.dtype != cdtype:
        x2 = x2.astype(cdtype)

    in_isize = jnp.dtype(cdtype).itemsize
    out_isize = jnp.dtype(out_dtype).itemsize
    sub = 16 if in_isize == 2 else 8

    hw_budget = _vmem_budget_bytes()
    tiling_budget = vmem_budget_bytes if vmem_budget_bytes is not None else hw_budget
    tm, gm, m_pad, tn, gn, tk, gk = _choose_tiles(
        M, k_pad, n_pad, in_isize, out_isize, sub, tiling_budget,
        tm_target=tm_target, tn_target=tn_target)

    # Per-call padding is only for the activation x (parameters were padded at load).
    if (m_pad, k_pad) != x2.shape:
        x2 = jnp.pad(x2, ((0, m_pad - M), (0, k_pad - K)))

    transc = M * N if activation in ("tanh", "sigmoid", "gelu") else 0
    x_reads = 1 if gk == 1 else gn   # collapsed path: x panel DMA'd once per row-panel
    cost = pl.CostEstimate(
        flops=2 * M * K * N,
        transcendentals=transc,
        bytes_accessed=int(m_pad * k_pad * in_isize * x_reads
                           + k_pad * n_pad * in_isize * gm
                           + n_pad * 4
                           + m_pad * n_pad * out_isize),
    )

    if gk == 1:
        kernel = functools.partial(_linear_bias_act_kernel, activation=activation)
        grid_spec = pltpu.PrefetchScalarGridSpec(
            num_scalar_prefetch=0,
            grid=(gm, gn),
            in_specs=[
                pl.BlockSpec((tm, k_pad), lambda i, j: (i, 0)),   # x row-panel
                pl.BlockSpec((k_pad, tn), lambda i, j: (0, j)),   # weight col-panel
                pl.BlockSpec((1, tn), lambda i, j: (0, j)),       # bias tile
            ],
            out_specs=pl.BlockSpec((tm, tn), lambda i, j: (i, j)),
        )
        semantics = ("parallel", "parallel")
    else:
        kernel = functools.partial(_linear_bias_act_ksplit_kernel, activation=activation)
        grid_spec = pltpu.PrefetchScalarGridSpec(
            num_scalar_prefetch=0,
            grid=(gm, gn, gk),
            in_specs=[
                pl.BlockSpec((tm, tk), lambda i, j, k: (i, k)),
                pl.BlockSpec((tk, tn), lambda i, j, k: (k, j)),
                pl.BlockSpec((1, tn), lambda i, j, k: (0, j)),
            ],
            out_specs=pl.BlockSpec((tm, tn), lambda i, j, k: (i, j)),
            scratch_shapes=[pltpu.VMEM((tm, tn), jnp.float32)],
        )
        semantics = ("parallel", "parallel", "arbitrary")

    out = pl.pallas_call(
        kernel,
        out_shape=jax.ShapeDtypeStruct((m_pad, n_pad), out_dtype),
        grid_spec=grid_spec,
        compiler_params=pltpu.CompilerParams(
            dimension_semantics=semantics,
            vmem_limit_bytes=hw_budget,
        ),
        cost_estimate=cost,
    )(x2, w_t, bias2d)

    out = out[:M, :N]
    return out.reshape(orig_shape[:-1] + (N,))


# ----------------------------------------------------------------------------
# Self-test
# ----------------------------------------------------------------------------
if __name__ == "__main__":
    key = jax.random.PRNGKey(0)

    def make_case(k, batch, input_size, output_size):
        k_x, k_w, k_b = jax.random.split(k, 3)
        bound = 1.0 / math.sqrt(input_size)
        x = jax.random.normal(k_x, (batch, input_size), dtype=jnp.float32)
        weight = jax.random.uniform(
            k_w, (output_size, input_size),
            minval=-bound, maxval=bound, dtype=jnp.float32)
        bias = jax.random.uniform(
            k_b, (output_size,),
            minval=-bound, maxval=bound, dtype=jnp.float32)
        return x, weight, bias

    k1, k2, k3 = jax.random.split(key, 3)

    # Case 1: tiny, unaligned shapes (padding / slice-off path, collapsed K).
    x, weight, bias = make_case(k1, 8, 32, 16)
    params = prepare_classifier_params(weight, bias)
    y = jax.block_until_ready(classifier_forward(x, params, activation=None))
    y_ref = x @ weight.T + bias
    assert y.shape == y_ref.shape
    assert jnp.allclose(y, y_ref, atol=2e-3, rtol=2e-3), "case 1 mismatch"

    # Case 2: multi-tile M, relu, collapsed-K fast path (2-D grid, no scratch).
    x, weight, bias = make_case(k2, 256, 1024, 384)
    params = prepare_classifier_params(weight, bias)
    y = jax.block_until_ready(classifier_forward(x, params, activation="relu"))
    y_ref = jnp.maximum(x @ weight.T + bias, 0.0)
    assert y.shape == y_ref.shape
    assert jnp.allclose(y, y_ref, atol=2e-3, rtol=2e-3), "case 2 mismatch"

    # Case 3: same problem with a forced-tiny VMEM budget to exercise the 3-D
    # K-reduction fallback (accumulator scratch + pl.when init/finalize).
    y = jax.block_until_ready(
        classifier_forward(x, params, activation="relu",
                           vmem_budget_bytes=2 * 1024 * 1024))
    assert y.shape == y_ref.shape
    assert jnp.allclose(y, y_ref, atol=2e-3, rtol=2e-3), "case 3 mismatch"

    # Case 4: bf16 operands (load-time cast), f32 accumulation, tanh finalize.
    x, weight, bias = make_case(k3, 128, 512, 256)
    params_bf16 = prepare_classifier_params(weight, bias, compute_dtype=jnp.bfloat16)
    y = jax.block_until_ready(classifier_forward(x, params_bf16, activation="tanh"))
    y_ref = jnp.tanh(x @ weight.T + bias)
    assert y.shape == y_ref.shape and y.dtype == jnp.float32
    assert jnp.allclose(y, y_ref, atol=2e-2, rtol=2e-2), "case 4 mismatch"

    print("KERNEL_OK")
</pallas_src>

<mosaic_0001>
module attributes {stable_mosaic.version = 11 : i64} {
  func.func @_linear_bias_act_kernel(%arg0: i32, %arg1: i32, %arg2: memref<8x128xf32, #tpu.memory_space<vmem>>, %arg3: memref<128x128xf32, #tpu.memory_space<vmem>>, %arg4: memref<1x128xf32, #tpu.memory_space<vmem>>, %arg5: memref<8x128xf32, #tpu.memory_space<vmem>>) attributes {dimension_semantics = [#tpu.dimension_semantics<parallel>, #tpu.dimension_semantics<parallel>], iteration_bounds = array<i64: 1, 1>, scalar_prefetch = 0 : i64, scratch_operands = 0 : i64, tpu.core_type = #tpu.core_type<tc>, window_params = [{transform_indices = @transform_0, window_bounds = array<i64: 8, 128>}, {transform_indices = @transform_1, window_bounds = array<i64: 128, 128>}, {transform_indices = @transform_2, window_bounds = array<i64: 1, 128>}, {transform_indices = @transform_3, window_bounds = array<i64: 8, 128>}]} {
    %c0 = arith.constant 0 : index
    %c0_0 = arith.constant 0 : index
    %0 = vector.load %arg2[%c0, %c0_0] : memref<8x128xf32, #tpu.memory_space<vmem>>, vector<8x128xf32>
    %c0_1 = arith.constant 0 : index
    %c0_2 = arith.constant 0 : index
    %1 = vector.load %arg3[%c0_1, %c0_2] : memref<128x128xf32, #tpu.memory_space<vmem>>, vector<128x128xf32>
    %cst = arith.constant dense<0.000000e+00> : vector<8x128xf32>
    %2 = tpu.matmul %0, %1, %cst {dimension_numbers = #tpu.dot_dimension_numbers<[1], [0], [0], [1], [0, 0, 1, 1], [], []>} : vector<8x128xf32>, vector<128x128xf32>, vector<8x128xf32> -> vector<8x128xf32>
    %c0_3 = arith.constant 0 : index
    %c0_4 = arith.constant 0 : index
    %3 = vector.load %arg4[%c0_3, %c0_4] : memref<1x128xf32, #tpu.memory_space<vmem>>, vector<1x128xf32>
    %4 = vector.broadcast %3 : vector<1x128xf32> to vector<8x128xf32>
    %5 = arith.addf %2, %4 : vector<8x128xf32>
    %c0_5 = arith.constant 0 : index
    %c0_6 = arith.constant 0 : index
    %6 = vector.load %arg5[%c0_5, %c0_6] : memref<8x128xf32, #tpu.memory_space<vmem>>, vector<8x128xf32>
    tpu.vector_store %arg5[%c0_5, %c0_6], %5 {strides = array<i32>} : memref<8x128xf32, #tpu.memory_space<vmem>>, vector<8x128xf32>,
    return
  }
  func.func @transform_0(%arg0: i32, %arg1: i32) -> (i32, i32) {
    %c0_i32 = arith.constant 0 : i32
    %c0_i32_0 = arith.constant 0 : i32
    return %arg0, %c0_i32 : i32, i32
  }
  func.func @transform_1(%arg0: i32, %arg1: i32) -> (i32, i32) {
    %c0_i32 = arith.constant 0 : i32
    %c0_i32_0 = arith.constant 0 : i32
    return %c0_i32, %arg1 : i32, i32
  }
  func.func @transform_2(%arg0: i32, %arg1: i32) -> (i32, i32) {
    %c0_i32 = arith.constant 0 : i32
    %c0_i32_0 = arith.constant 0 : i32
    return %c0_i32, %arg1 : i32, i32
  }
  func.func @transform_3(%arg0: i32, %arg1: i32) -> (i32, i32) {
    %c0_i32 = arith.constant 0 : i32
    return %arg0, %arg1 : i32, i32
  }
}

</mosaic_0001>

<llo_original>
// kernel: tpu_custom_call.1
$region0: #{tpu_custom_call.1}
  #allocation0 [shape = 'u32[]', space=smem, size = 0x4, offset = 0x4, fixed_abs, tag = 'smem constant byte address 0x4 - core index']
  #allocation1 [shape = 'u32[144,128]{1,0:T(1,128)}', space=vmem, size = 0x12000, scoped, tag = 'internal scratch']
  %s0 = inlined_call_operand.hbm [shape: f32[8,128], index: 0, kind: input, shape index: {}]
  %s1 = inlined_call_operand.hbm [shape: f32[128,128], index: 1, kind: input, shape index: {}]
  %s2 = inlined_call_operand.vmem [shape: f32[1,128], index: 2, kind: input, shape index: {}]
  %s3 = inlined_call_operand.hbm [shape: f32[8,128], index: 3, kind: output, shape index: {}]
  %s4 = sld [smem:[#allocation0]]
  $region30: #{tpu_custom_call.1} parent=0
    _
  %s6 = ssub.s32 1, %s4
  %s7 = scalar_select 0, %s6, %s4
  $region1: #{tpu_custom_call.1} parent=0
    #allocation2 [shape = 'u8[4096]{0}', space=vmem, size = 0x1000, scoped, tag = 'input window, operand 0, single buffered']
    #allocation3 [shape = 's32[1]{0}', space=sflag, size = 0x4, scoped, tag = 'scoped memory for tpu_custom_call.1']
    #allocation4 [shape = 's32[1]{0}', space=sflag, size = 0x4, scoped, tag = 'scoped memory for tpu_custom_call.1']
    #allocation5 [shape = 'u8[65536]{0}', space=vmem, size = 0x10000, scoped, tag = 'input window, operand 1, single buffered']
    #allocation6 [shape = 's32[1]{0}', space=sflag, size = 0x4, scoped, tag = 'scoped memory for tpu_custom_call.1']
    #allocation7 [shape = 'u8[4096]{0}', space=vmem, size = 0x1000, scoped, tag = 'output window, operand 0, single buffered']
    %8 = vsyncpa [#allocation3], 0
    %9 = vsyncpa [#allocation6], 0
    %10 = vsyncpa [#allocation4], 0
    // Predicated region
    $region2: #{tpu_custom_call.1} parent=1 // pred_check
      _
    $region3: #{tpu_custom_call.1} parent=1 // pred_check_branch
      %12 = sbr.rel (0) target = $region5
    $region4: #{tpu_custom_call.1} parent=1 // pred_region
      %s14 = ssub.s32 128, 128
      %15 = vsyncadd [#allocation3], %s14
      %s17 = sshll.u32 [#allocation2], 4
      %s18 = int_to_ptr.vmem [resolvable:$true] %s17
      %20 = dma.hbm_to_vmem [thread:$0]  %s0, 128, %s18, [#allocation3]
    $region5: #{tpu_custom_call.1} parent=1 // pred_fallthru
      _
    // Predicated region
    $region6: #{tpu_custom_call.1} parent=1 // pred_check
      _
    $region7: #{tpu_custom_call.1} parent=1 // pred_check_branch
      %22 = sbr.rel (0) target = $region9
    $region8: #{tpu_custom_call.1} parent=1 // pred_region
      %s24 = ssub.s32 2048, 2048
      %25 = vsyncadd [#allocation6], %s24
      %s26 = sshll.u32 [#allocation5], 4
      %s27 = int_to_ptr.vmem [resolvable:$true] %s26
      %32 = dma.hbm_to_vmem [thread:$0]  %s1, 2048, %s27, [#allocation6], 128, 128, 8
    $region9: #{tpu_custom_call.1} parent=1 // pred_fallthru
      _
    // Predicated region
    $region10: #{tpu_custom_call.1} parent=1 // pred_check
      _
    $region11: #{tpu_custom_call.1} parent=1 // pred_check_branch
      %34 = sbr.rel (0) target = $region13
    $region12: #{tpu_custom_call.1} parent=1 // pred_region
      _
    $region13: #{tpu_custom_call.1} parent=1 // pred_fallthru
      _
    // Predicated region
    $region14: #{tpu_custom_call.1} parent=1 // pred_check
      _
    $region15: #{tpu_custom_call.1} parent=1 // pred_check_branch
      %36 = sbr.rel (0) target = $region17
    $region16: #{tpu_custom_call.1} parent=1 // pred_region
      %37 = dma.done [#allocation3], 128
    $region17: #{tpu_custom_call.1} parent=1 // pred_fallthru
      _
    // Predicated region
    $region18: #{tpu_custom_call.1} parent=1 // pred_check
      _
    $region19: #{tpu_custom_call.1} parent=1 // pred_check_branch
      %39 = sbr.rel (0) target = $region21
    $region20: #{tpu_custom_call.1} parent=1 // pred_region
      %40 = dma.done [#allocation6], 2048
    $region21: #{tpu_custom_call.1} parent=1 // pred_fallthru
      _
    %v41 = vld [vmem:[#allocation2] sm:$0xff]
    %v42 = vld [vmem:[#allocation5] sm:$0xff]
    %v43 = vld [vmem:[#allocation5 + $0x8] sm:$0xff]
    %v44 = vld [vmem:[#allocation5 + $0x10] sm:$0xff]
    %v45 = vld [vmem:[#allocation5 + $0x18] sm:$0xff]
    %v46 = vld [vmem:[#allocation5 + $0x20] sm:$0xff]
    %v47 = vld [vmem:[#allocation5 + $0x28] sm:$0xff]
    %v48 = vld [vmem:[#allocation5 + $0x30] sm:$0xff]
    %v49 = vld [vmem:[#allocation5 + $0x38] sm:$0xff]
    %v50 = vld [vmem:[#allocation5 + $0x40] sm:$0xff]
    %v51 = vld [vmem:[#allocation5 + $0x48] sm:$0xff]
    %v52 = vld [vmem:[#allocation5 + $0x50] sm:$0xff]
    %v53 = vld [vmem:[#allocation5 + $0x58] sm:$0xff]
    %v54 = vld [vmem:[#allocation5 + $0x60] sm:$0xff]
    %v55 = vld [vmem:[#allocation5 + $0x68] sm:$0xff]
    %v56 = vld [vmem:[#allocation5 + $0x70] sm:$0xff]
    %v57 = vld [vmem:[#allocation5 + $0x78] sm:$0xff]
    %v58 = vld [vmem:[%s2] sm:$0x1]
    %v60 = vlaneseq
    %v61 = vshrl.u32 %v60, 7
    %v62 = vsub.s32 0, %v61
    %v63 = vrot.slane %v58, %v62
    %65 = vmatprep.subr.mxu0 0.0
    %66 = vmatpush1.msra.mxu0 %v42
    %67 = vmatprep.subr.mxu0 0.0
    %68 = vmatpush1.msra.mxu0 %v43
    %69 = vmatprep.subr.mxu0 0.0
    %70 = vmatpush1.msra.mxu0 %v44
    %71 = vmatprep.subr.mxu0 0.0
    %72 = vmatpush1.msra.mxu0 %v45
    %73 = vmatprep.subr.mxu0 0.0
    %74 = vmatpush1.msra.mxu0 %v46
    %75 = vmatprep.subr.mxu0 0.0
    %76 = vmatpush1.msra.mxu0 %v47
    %77 = vmatprep.subr.mxu0 0.0
    %78 = vmatpush1.msra.mxu0 %v48
    %79 = vmatprep.subr.mxu0 0.0
    %80 = vmatpush1.msra.mxu0 %v49
    %81 = vmatprep.subr.mxu0 0.0
    %82 = vmatpush1.msra.mxu0 %v50
    %83 = vmatprep.subr.mxu0 0.0
    %84 = vmatpush1.msra.mxu0 %v51
    %85 = vmatprep.subr.mxu0 0.0
    %86 = vmatpush1.msra.mxu0 %v52
    %87 = vmatprep.subr.mxu0 0.0
    %88 = vmatpush1.msra.mxu0 %v53
    %89 = vmatprep.subr.mxu0 0.0
    %90 = vmatpush1.msra.mxu0 %v54
    %91 = vmatprep.subr.mxu0 0.0
    %92 = vmatpush1.msra.mxu0 %v55
    %93 = vmatprep.subr.mxu0 0.0
    %94 = vmatpush1.msra.mxu0 %v56
    %95 = vmatprep.subr.mxu0 0.0
    %96 = vmatpush1.msra.mxu0 %v57
    %97 = vmatprep.subr.mxu0 0.0
    %98 = vmatpush1.msra.mxu0 0.0
    %99 = vmatprep.subr.mxu0 0.0
    %100 = vmatpush1.msra.mxu0 0.0
    %101 = vmatprep.subr.mxu0 0.0
    %102 = vmatpush1.msra.mxu0 0.0
    %103 = vmatprep.subr.mxu0 0.0
    %104 = vmatpush1.msra.mxu0 0.0
    %105 = vmatprep.subr.mxu0 0.0
    %106 = vmatpush1.msra.mxu0 0.0
    %107 = vmatprep.subr.mxu0 0.0
    %108 = vmatpush1.msra.mxu0 0.0
    %109 = vmatprep.subr.mxu0 0.0
    %110 = vmatpush1.msra.mxu0 0.0
    %111 = vmatprep.subr.mxu0 0.0
    %112 = vmatpush1.msra.mxu0 0.0
    %113 = vmatprep.subr.mxu0 0.0
    %114 = vmatpush1.msra.mxu0 0.0
    %115 = vmatprep.subr.mxu0 0.0
    %116 = vmatpush1.msra.mxu0 0.0
    %117 = vmatprep.subr.mxu0 0.0
    %118 = vmatpush1.msra.mxu0 0.0
    %119 = vmatprep.subr.mxu0 0.0
    %120 = vmatpush1.msra.mxu0 0.0
    %121 = vmatprep.subr.mxu0 0.0
    %122 = vmatpush1.msra.mxu0 0.0
    %123 = vmatprep.subr.mxu0 0.0
    %124 = vmatpush1.msra.mxu0 0.0
    %125 = vmatprep.subr.mxu0 0.0
    %126 = vmatpush1.msra.mxu0 0.0
    %127 = vmatprep.subr.mxu0 0.0
    %128 = vmatpush1.msra.mxu0 0.0
    %129 = vmatprep.mubr.f32.mxu0 0.0
    %130 = vmatmul.mubr.f32.gmra.mrb[0].mxu0 %v41
    %v131 = vpop.f32.mrb[0].mxu0
    %v132 = vadd.f32 %v63, %v131
    %v133 = vpop.f32.mrb[0].mxu0
    %134 = vdwg.mxu0
    %135 = vst [vmem:[#allocation7] sm:$0xff] %v132
    // Predicated region
    $region22: #{tpu_custom_call.1} parent=1 // pred_check
      _
    $region23: #{tpu_custom_call.1} parent=1 // pred_check_branch
      %137 = sbr.rel (0) target = $region25
    $region24: #{tpu_custom_call.1} parent=1 // pred_region
      %s139 = ssub.s32 128, 128
      %140 = vsyncadd [#allocation4], %s139
      %s142 = sshll.u32 [#allocation7], 4
      %s143 = int_to_ptr.vmem [resolvable:$true] %s142
      %145 = dma.vmem_to_hbm [thread:$0]  %s143, 128, %s3, [#allocation4]
    $region25: #{tpu_custom_call.1} parent=1 // pred_fallthru
      _
    // Predicated region
    $region26: #{tpu_custom_call.1} parent=1 // pred_check
      _
    $region27: #{tpu_custom_call.1} parent=1 // pred_check_branch
      %147 = sbr.rel (0) target = $region29
    $region28: #{tpu_custom_call.1} parent=1 // pred_region
      %148 = dma.done [#allocation4], 128
    $region29: #{tpu_custom_call.1} parent=1 // pred_fallthru
      _
    %149 = vsyncpa [#allocation3], 1
    %150 = vsyncpa [#allocation6], 1
    %151 = vsyncpa [#allocation4], 1

</llo_original>
